<compile_context>
chip_gen: v5e
topology: v5e:2x2
jax: 0.10.0
libtpu: 0.0.40
codegen_flags: <defaults>
</compile_context>

<pallas_src>
import jax
import jax.numpy as jnp
from jax.experimental import pallas as pl
from jax.experimental.pallas import tpu as pltpu


def _round_up(x, m):
    return (x + m - 1) // m * m


def linear_kernel(x_ref, wt_ref, o_ref):
    # x_ref : (TB, IN)       batch tile of activations
    # wt_ref: (IN, OUT_PAD)  pre-transposed, lane-padded weight (broadcast block)
    # o_ref : (TB, OUT_PAD)  lane-dense output tile (last dim multiple of 128)
    #
    # Contract last-dim(x) against first-dim(wt) on the MXU with f32
    # accumulation — no transpose, no masked partial stores.
    o_ref[...] = jnp.dot(
        x_ref[...], wt_ref[...], preferred_element_type=jnp.float32
    ).astype(o_ref.dtype)


def simple_nn_forward(x, weight, bias, *, batch_tile=512):
    """Pallas equivalent of SimpleNN.forward (a single nn.Linear(4, 3)).

    NB: at (2, 4) x (4, 3) a custom call is pure launch/DMA overhead — the
    kernel is structured (batch-tiled, parallel grid, lane-dense output) so it
    only starts paying off at realistic batch sizes.
    """
    B, IN = x.shape
    OUT, IN_w = weight.shape
    assert IN == IN_w

    # Lane-dense output width (last dim multiple of 128).
    OUT_PAD = _round_up(OUT, 128)

    # Batch tiling: one sublane-aligned block for small batches, 512-row tiles
    # (double-buffered blocks are tiny, fits all of v5e/v6e/v7x VMEM) otherwise.
    if B <= batch_tile:
        B_pad = _round_up(B, 8)
        tb = B_pad
    else:
        B_pad = _round_up(B, batch_tile)
        tb = batch_tile

    x_pad = x if B_pad == B else jnp.pad(x, ((0, B_pad - B), (0, 0)))

    # Pre-transpose to [IN, OUT] (free, host/XLA side) and zero-pad lanes.
    wt_pad = jnp.zeros((IN, OUT_PAD), dtype=weight.dtype).at[:, :OUT].set(weight.T)

    grid = (B_pad // tb,)

    out_pad = pl.pallas_call(
        linear_kernel,
        out_shape=jax.ShapeDtypeStruct((B_pad, OUT_PAD), jnp.float32),
        grid_spec=pltpu.PrefetchScalarGridSpec(
            num_scalar_prefetch=0,
            grid=grid,
            in_specs=[
                pl.BlockSpec((tb, IN), lambda i: (i, 0)),       # batch tile of x
                pl.BlockSpec((IN, OUT_PAD), lambda i: (0, 0)),  # broadcast weight
            ],
            out_specs=pl.BlockSpec((tb, OUT_PAD), lambda i: (i, 0)),
        ),
        compiler_params=pltpu.CompilerParams(
            dimension_semantics=("parallel",),  # shards batch across TCs on v7x
        ),
    )(x_pad, wt_pad)

    # Slice away padding; fold the 3-scalar bias in as a fused XLA epilogue
    # (cheaper than a dedicated padded (8,128) VMEM block + DMA channel).
    return out_pad[:B, :OUT] + bias


if __name__ == "__main__":
    key = jax.random.PRNGKey(0)
    k_x, k_w, k_b, k_x2 = jax.random.split(key, 4)

    # Linear(4, 3) => weight (3, 4), bias (3,); mimic PyTorch's init range.
    in_features, out_features = 4, 3
    batch = 2
    bound = 1.0 / (in_features ** 0.5)
    weight = jax.random.uniform(
        k_w, (out_features, in_features), jnp.float32, -bound, bound)
    bias = jax.random.uniform(
        k_b, (out_features,), jnp.float32, -bound, bound)

    # Small-shape path (single block).
    x = jax.random.normal(k_x, (batch, in_features), jnp.float32)
    out = jax.block_until_ready(simple_nn_forward(x, weight, bias))
    ref = x @ weight.T + bias
    assert out.shape == (batch, out_features)
    assert jnp.allclose(out, ref, atol=1e-5, rtol=1e-5)

    # Also exercise the batch-tiled, multi-grid-step ("parallel") path.
    x_big = jax.random.normal(k_x2, (1031, in_features), jnp.float32)
    out_big = jax.block_until_ready(simple_nn_forward(x_big, weight, bias))
    ref_big = x_big @ weight.T + bias
    assert out_big.shape == ref_big.shape
    assert jnp.allclose(out_big, ref_big, atol=1e-5, rtol=1e-5)

    print("KERNEL_OK")
</pallas_src>

<mosaic_0001>
module attributes {stable_mosaic.version = 11 : i64} {
  func.func @linear_kernel(%arg0: i32, %arg1: memref<8x4xf32, #tpu.memory_space<vmem>>, %arg2: memref<4x128xf32, #tpu.memory_space<vmem>>, %arg3: memref<8x128xf32, #tpu.memory_space<vmem>>) attributes {dimension_semantics = [#tpu.dimension_semantics<parallel>], iteration_bounds = array<i64: 1>, scalar_prefetch = 0 : i64, scratch_operands = 0 : i64, tpu.core_type = #tpu.core_type<tc>, window_params = [{transform_indices = @transform_0, window_bounds = array<i64: 8, 4>}, {pipeline_mode = #tpu.pipeline_mode<synchronous>, transform_indices = @transform_1, window_bounds = array<i64: 4, 128>}, {transform_indices = @transform_2, window_bounds = array<i64: 8, 128>}]} {
    %c0 = arith.constant 0 : index
    %c0_0 = arith.constant 0 : index
    %0 = vector.load %arg1[%c0, %c0_0] : memref<8x4xf32, #tpu.memory_space<vmem>>, vector<8x4xf32>
    %c0_1 = arith.constant 0 : index
    %c0_2 = arith.constant 0 : index
    %1 = vector.load %arg2[%c0_1, %c0_2] : memref<4x128xf32, #tpu.memory_space<vmem>>, vector<4x128xf32>
    %cst = arith.constant dense<0.000000e+00> : vector<8x128xf32>
    %2 = tpu.matmul %0, %1, %cst {dimension_numbers = #tpu.dot_dimension_numbers<[1], [0], [0], [1], [0, 0, 1, 1], [], []>} : vector<8x4xf32>, vector<4x128xf32>, vector<8x128xf32> -> vector<8x128xf32>
    %c0_3 = arith.constant 0 : index
    %c0_4 = arith.constant 0 : index
    %3 = vector.load %arg3[%c0_3, %c0_4] : memref<8x128xf32, #tpu.memory_space<vmem>>, vector<8x128xf32>
    tpu.vector_store %arg3[%c0_3, %c0_4], %2 {strides = array<i32>} : memref<8x128xf32, #tpu.memory_space<vmem>>, vector<8x128xf32>,
    return
  }
  func.func @transform_0(%arg0: i32) -> (i32, i32) {
    %c0_i32 = arith.constant 0 : i32
    %c0_i32_0 = arith.constant 0 : i32
    return %arg0, %c0_i32 : i32, i32
  }
  func.func @transform_1(%arg0: i32) -> (i32, i32) {
    %c0_i32 = arith.constant 0 : i32
    %c0_i32_0 = arith.constant 0 : i32
    %c0_i32_1 = arith.constant 0 : i32
    return %c0_i32, %c0_i32_0 : i32, i32
  }
  func.func @transform_2(%arg0: i32) -> (i32, i32) {
    %c0_i32 = arith.constant 0 : i32
    %c0_i32_0 = arith.constant 0 : i32
    return %arg0, %c0_i32 : i32, i32
  }
}

</mosaic_0001>

<llo_original>
// kernel: tpu_custom_call.1
$region0: #{tpu_custom_call.1}
  #allocation0 [shape = 'u32[]', space=smem, size = 0x4, offset = 0x4, fixed_abs, tag = 'smem constant byte address 0x4 - core index']
  #allocation1 [shape = 'u32[72,128]{1,0:T(1,128)}', space=vmem, size = 0x9000, scoped, tag = 'internal scratch']
  %s0 = inlined_call_operand.vmem [shape: f32[8,4], index: 0, kind: input, shape index: {}]
  %s1 = inlined_call_operand.vmem [shape: f32[4,128], index: 1, kind: input, shape index: {}]
  %s2 = inlined_call_operand.hbm [shape: f32[8,128], index: 2, kind: output, shape index: {}]
  %s3 = sld [smem:[#allocation0]]
  $region18: #{tpu_custom_call.1} parent=0
    _
  %s5 = ssub.s32 1, %s3
  %s6 = scalar_select 0, %s5, %s3
  $region1: #{tpu_custom_call.1} parent=0
    #allocation2 [shape = 'u8[4096]{0}', space=vmem, size = 0x1000, scoped, tag = 'output window, operand 0, single buffered']
    #allocation3 [shape = 's32[1]{0}', space=sflag, size = 0x4, scoped, tag = 'scoped memory for tpu_custom_call.1']
    %7 = vsyncpa [#allocation3], 0
    // Predicated region
    $region2: #{tpu_custom_call.1} parent=1 // pred_check
      _
    $region3: #{tpu_custom_call.1} parent=1 // pred_check_branch
      %9 = sbr.rel (0) target = $region5
    $region4: #{tpu_custom_call.1} parent=1 // pred_region
      _
    $region5: #{tpu_custom_call.1} parent=1 // pred_fallthru
      _
    // Predicated region
    $region6: #{tpu_custom_call.1} parent=1 // pred_check
      _
    $region7: #{tpu_custom_call.1} parent=1 // pred_check_branch
      %11 = sbr.rel (0) target = $region9
    $region8: #{tpu_custom_call.1} parent=1 // pred_region
      _
    $region9: #{tpu_custom_call.1} parent=1 // pred_fallthru
      _
    %v12 = vld [vmem:[%s0] sm:$0xff]
    %v13 = vld [vmem:[%s1] sm:$0xf]
    %vm14 = vcmask 31744
    %v16 = vsel %vm14, %v12, 0
    %vm18 = vcmask 1043456
    %v20 = vsel %vm18, %v13, 0
    %22 = vmatpush.msra.mxu0 0.0
    %23 = vmatpush.msra.mxu0 0.0
    %24 = vmatpush.msra.mxu0 0.0
    %25 = vmatpush.msra.mxu0 0.0
    %26 = vmatpush.msra.mxu0 0.0
    %27 = vmatpush.msra.mxu0 0.0
    %28 = vmatpush.msra.mxu0 0.0
    %29 = vmatpush.msra.mxu0 0.0
    %30 = vmatpush.msra.mxu0 0.0
    %31 = vmatpush.msra.mxu0 0.0
    %32 = vmatpush.msra.mxu0 0.0
    %33 = vmatpush.msra.mxu0 0.0
    %34 = vmatpush.msra.mxu0 0.0
    %35 = vmatpush.msra.mxu0 0.0
    %36 = vmatpush.msra.mxu0 0.0
    %37 = vmatpush.msra.mxu0 %v20
    %38 = vmatmul.f32.gmra.mxu0 %v16
    %v39 = vpop.f32.mrf.mxu0
    %v40 = vadd.f32 0.0, %v39
    %41 = vdwg.mxu0
    %42 = vst [vmem:[#allocation2] sm:$0xff] %v40
    // Predicated region
    $region10: #{tpu_custom_call.1} parent=1 // pred_check
      _
    $region11: #{tpu_custom_call.1} parent=1 // pred_check_branch
      %44 = sbr.rel (0) target = $region13
    $region12: #{tpu_custom_call.1} parent=1 // pred_region
      %46 = vsyncadd [#allocation3], 0
      %s48 = sshll.u32 [#allocation2], 4
      %s49 = int_to_ptr.vmem [resolvable:$true] %s48
      %s50 = sshll.u32 %s2, 4
      %s51 = int_to_ptr.hbm [resolvable:$true] %s50
      %53 = dma.vmem_to_hbm [thread:$0]  %s49, 128, %s51, [#allocation3]
    $region13: #{tpu_custom_call.1} parent=1 // pred_fallthru
      _
    // Predicated region
    $region14: #{tpu_custom_call.1} parent=1 // pred_check
      _
    $region15: #{tpu_custom_call.1} parent=1 // pred_check_branch
      %55 = sbr.rel (0) target = $region17
    $region16: #{tpu_custom_call.1} parent=1 // pred_region
      %57 = dma.done [#allocation3], 128
    $region17: #{tpu_custom_call.1} parent=1 // pred_fallthru
      _
    %58 = vsyncpa [#allocation3], 1

</llo_original>
